<compile_context>
chip_gen: v7x
topology: tpu7x:2x2x1
jax: 0.10.0
libtpu: 0.0.40
codegen_flags: <defaults>
</compile_context>

<pallas_src>
import math

import jax
import jax.numpy as jnp
from jax.experimental import pallas as pl
from jax.experimental.pallas import tpu as pltpu

# ---------------- configuration (HyenaConfig equivalents) ----------------
DIM = 8                   # hyena_config.dim
ORDER = 2                 # hyena_config.order
L_MAX = 32                # layer_config.l_max
EMB_DIM = 5               # hyena_config.emb_dim (odd, >= 3)
FILTER_ORDER = 16         # layer_config.filter_order (width of implicit-filter MLP)
NUM_INNER_MLPS = 1        # layer_config.num_inner_mlps
SHORT_ORDER = 3           # hyena_config.short_filter_order
SHORT_PAD = 2             # Conv1d(padding=2)
ACT_FREQ = 1.0            # layer_config.activation_freq
INNER = DIM * (ORDER + 1)        # width after in_proj
FILT_DIM = DIM * (ORDER - 1)     # implicit-filter width == layer_config.dim (out_proj out)
MOD_FAST = 0.3
MOD_SLOW = 1.5
MOD_TARGET = 0.01
MOD_SHIFT = 0.05
# dropout / filter_dropout are 0.0 here (identity), matching eval semantics.


# ----------------------------- Pallas kernel -----------------------------
def _hyena_fused_kernel(u_ref, w1_ref, b1_ref, t_ref, kb_ref, w2_ref, b2_ref, o_ref):
    """Fused HyenaOperator forward, whole (tiny) problem in one VMEM block.

    Layouts (all lane-dense for L=32):
      u_ref  : (B, L*DIM)              row-major flatten of (B, L, DIM), index t*DIM+d
      w1_ref : (L*DIM, INNER*L)        in_proj folded with the depthwise short conv;
                                       output index = c*L + t (channel-major flat)
      b1_ref : (1, INNER*L)
      t_ref  : (ORDER-1, DIM*L, DIM*L) channel-block-diagonal causal Toeplitz of the
                                       implicit long filter k (== fftconv truncated to L)
      kb_ref : (ORDER-1, 1, DIM*L)     filter bias D, repeated along t
      w2_ref : (DIM*L, L*FILT_DIM)     out_proj, maps (d*L+t) -> (t*FILT_DIM+f)
      b2_ref : (1, L*FILT_DIM)
      o_ref  : (B, L*FILT_DIM)         row-major flatten of (B, L, FILT_DIM)
    """
    dl = t_ref.shape[-1]  # DIM * L

    # in_proj + short depthwise conv: one MXU matmul.
    uc = jnp.dot(u_ref[...], w1_ref[...], preferred_element_type=jnp.float32) + b1_ref[...]

    # Channel groups are contiguous, vreg-aligned lane slices in the (c*L + t) layout.
    x0 = uc[:, 0:dl]
    v = uc[:, ORDER * dl:(ORDER + 1) * dl]

    # Hyena recurrence: gate, long implicit-filter conv as a Toeplitz matmul on the
    # MXU (mathematically identical to the FFT-based fftconv), plus the `u * D` term.
    for o in range(ORDER - 1):
        i = ORDER - 1 - o
        x_i = uc[:, i * dl:(i + 1) * dl]
        w = v * x_i
        v = jnp.dot(w, t_ref[o], preferred_element_type=jnp.float32) + w * kb_ref[o]

    # Final gate + out_proj; result lands directly in row-major (B, L*FILT_DIM)
    # -> fully lane-dense store (no masked vst).
    o_ref[...] = (
        jnp.dot(v * x0, w2_ref[...], preferred_element_type=jnp.float32) + b2_ref[...]
    ).astype(o_ref.dtype)


# ---------------- implicit filter (tiny MLP; plain JAX glue) ----------------
def compute_filter_k(params, L):
    bands = (EMB_DIM - 1) // 2
    t = jnp.linspace(0.0, 1.0, L_MAX, dtype=jnp.float32)[None, :, None]
    t_rescaled = jnp.linspace(0.0, L_MAX - 1.0, L_MAX, dtype=jnp.float32)[None, :, None]
    w = 2.0 * math.pi * t_rescaled / L_MAX
    f = jnp.linspace(1e-4, bands - 1.0, bands, dtype=jnp.float32)[None, None, :]
    zc = jnp.exp(-1j * f * w)
    z = jnp.concatenate([t, jnp.real(zc), jnp.imag(zc)], axis=-1)   # (1, L_MAX, EMB_DIM)
    z = z[:, :L]
    t = t[:, :L]

    h = z @ params["filt_w1"].T + params["filt_b1"]
    h = jnp.sin(params["freq"] * h)
    for i in range(NUM_INNER_MLPS):
        h = h @ params["filt_w2"][i].T + params["filt_b2"][i]
        h = jnp.sin(params["freq"] * h)
    h = h @ params["filt_w3"].T                                      # (1, L, FILT_DIM)

    decay = jnp.exp(-t * jnp.abs(params["deltas"]))                  # ExponentialModulation
    h = h * (decay + MOD_SHIFT)
    return h[0]                                                      # (L, FILT_DIM)


# ------------- fused operator construction (parameter-only work) -------------
def build_fused_operators(params, L):
    f32 = jnp.float32

    # ---- W1/b1: in_proj folded with the depthwise short Conv1d(k=3, pad=2)[..., :L] ----
    # S[c, t_src, t_out] = short_w[c, j] where t_src = t_out - 2 + j (zero-padded, causal).
    S = sum(
        params["short_w"][:, j][:, None, None] * jnp.eye(L, L, SHORT_PAD - j, dtype=f32)
        for j in range(SHORT_ORDER)
    )                                                                # (INNER, L, L)
    # W1[(t*DIM + d), (c*L + u)] = w_in[c, d] * S[c, t, u]
    w1 = jnp.einsum("cd,ctu->tdcu", params["w_in"], S).reshape(L * DIM, INNER * L)
    # b1[(c*L + u)] = short_b[c] + b_in[c] * sum_t S[c, t, u]   (in_proj bias through conv)
    b1 = (params["short_b"][:, None] + params["b_in"][:, None] * S.sum(axis=1)
          ).reshape(1, INNER * L)

    # ---- Toeplitz of the implicit long filter, block-diagonal over channels ----
    k = compute_filter_k(params, L)                                  # (L, FILT_DIM)
    k_odl = jnp.transpose(k.reshape(L, ORDER - 1, DIM), (1, 2, 0))   # (O-1, DIM, L)
    idx = jnp.arange(L)
    lag = idx[None, :] - idx[:, None]                                # lag[s, t] = t - s
    tmat = jnp.where(lag[None, None] >= 0,
                     jnp.take(k_odl, jnp.clip(lag, 0, L - 1), axis=2),
                     0.0)                                            # (O-1, DIM, L, L) [o,d,s,t]
    eye_d = jnp.eye(DIM, dtype=f32)
    # tbig[o, (d*L + s), (e*L + t)] = k[o, d, t-s] * (t >= s) * (d == e)
    tbig = jnp.einsum("odst,de->odset", tmat, eye_d).reshape(ORDER - 1, DIM * L, DIM * L)

    # filter bias D repeated along t: kb[o, d*L + t] = bias[o, d]
    kb = jnp.repeat(params["filter_bias"].reshape(ORDER - 1, DIM), L, axis=-1
                    ).reshape(ORDER - 1, 1, DIM * L)

    # ---- W2/b2: out_proj mapping (d*L + t) -> (t*FILT_DIM + f) ----
    eye_l = jnp.eye(L, dtype=f32)
    w2 = jnp.einsum("fd,tu->dtuf", params["w_out"], eye_l).reshape(DIM * L, L * FILT_DIM)
    b2 = jnp.tile(params["b_out"], L).reshape(1, L * FILT_DIM)

    return w1, b1, tbig, kb, w2, b2


# ------------------------------ full forward ------------------------------
def hyena_operator_forward(u, params):
    B, L_in, _ = u.shape
    l_filter = min(L_in, L_MAX)
    L = l_filter
    # Slice BEFORE projecting: the short conv is causal, so this is exact and avoids
    # wasted matmul/DMA work whenever L_in > L_MAX.
    u = u[:, :L]

    w1, b1, tbig, kb, w2, b2 = build_fused_operators(params, L)

    out_flat = pl.pallas_call(
        _hyena_fused_kernel,
        out_shape=jax.ShapeDtypeStruct((B, L * FILT_DIM), jnp.float32),
        in_specs=[pl.BlockSpec(memory_space=pltpu.MemorySpace.VMEM)] * 7,
        out_specs=pl.BlockSpec(memory_space=pltpu.MemorySpace.VMEM),
    )(u.reshape(B, L * DIM), w1, b1, tbig, kb, w2, b2)

    return out_flat.reshape(B, L, FILT_DIM)


# -------------------------- parameter construction --------------------------
def init_params(key):
    ks = jax.random.split(key, 12)

    def lin_w(k, fan_in, fan_out):
        return jax.random.normal(k, (fan_out, fan_in), jnp.float32) / math.sqrt(fan_in)

    max_decay = math.log(MOD_TARGET) / MOD_FAST
    min_decay = math.log(MOD_TARGET) / MOD_SLOW
    return {
        "w_in": lin_w(ks[0], DIM, INNER),
        "b_in": 0.02 * jax.random.normal(ks[1], (INNER,), jnp.float32),
        "w_out": lin_w(ks[2], DIM, FILT_DIM),
        "b_out": 0.02 * jax.random.normal(ks[3], (FILT_DIM,), jnp.float32),
        # Conv1d(groups=INNER) weight (INNER, 1, 3) stored as (INNER, 3)
        "short_w": jax.random.normal(ks[4], (INNER, SHORT_ORDER), jnp.float32)
        / math.sqrt(SHORT_ORDER),
        "short_b": 0.02 * jax.random.normal(ks[5], (INNER,), jnp.float32),
        "filt_w1": lin_w(ks[6], EMB_DIM, FILTER_ORDER),
        "filt_b1": 0.02 * jax.random.normal(ks[7], (FILTER_ORDER,), jnp.float32),
        "filt_w2": jax.random.normal(
            ks[8], (NUM_INNER_MLPS, FILTER_ORDER, FILTER_ORDER), jnp.float32
        ) / math.sqrt(FILTER_ORDER),
        "filt_b2": 0.02 * jax.random.normal(ks[9], (NUM_INNER_MLPS, FILTER_ORDER), jnp.float32),
        "filt_w3": lin_w(ks[10], FILTER_ORDER, FILT_DIM),
        "filter_bias": jax.random.normal(ks[11], (FILT_DIM,), jnp.float32),
        "freq": ACT_FREQ * jnp.ones((1, FILTER_ORDER), jnp.float32),
        "deltas": jnp.linspace(min_decay, max_decay, FILT_DIM, dtype=jnp.float32)[None, None, :],
    }


# ------------------------- pure-JAX reference (check) -------------------------
def _next_power_of_2(x):
    return 2 ** math.ceil(math.log2(x))


def _fftconv_ref(u, k, D):
    seqlen = u.shape[-1]
    fft_size = _next_power_of_2(2 * seqlen)
    k_f = jnp.fft.rfft(k, n=fft_size) / fft_size
    u_f = jnp.fft.rfft(u, n=fft_size)
    y = jnp.fft.irfft(u_f * k_f, n=fft_size, norm="forward")[..., :seqlen]
    return (y + u * D[:, None]).astype(u.dtype)


def reference_forward(u, params):
    B, L, _ = u.shape
    l_filter = min(L, L_MAX)
    up = u @ params["w_in"].T + params["b_in"]
    up = jnp.transpose(up, (0, 2, 1))
    wc = params["short_w"][:, None, :]
    uc = jax.lax.conv_general_dilated(
        up, wc, (1,), [(SHORT_PAD, SHORT_PAD)],
        dimension_numbers=("NCH", "OIH", "NCH"), feature_group_count=INNER,
    ) + params["short_b"][None, :, None]
    uc = uc[..., :l_filter]
    chunks = [uc[:, i * DIM:(i + 1) * DIM, :] for i in range(ORDER + 1)]
    x, v = chunks[:-1], chunks[-1]
    kf = compute_filter_k(params, l_filter)
    k_odl = jnp.transpose(kf.reshape(l_filter, ORDER - 1, DIM), (1, 2, 0))
    kb = params["filter_bias"].reshape(ORDER - 1, DIM)
    for o, x_i in enumerate(reversed(x[1:])):
        v = v * x_i
        v = _fftconv_ref(v, k_odl[o], kb[o])
    y = jnp.transpose(v * x[0], (0, 2, 1))
    return y @ params["w_out"].T + params["b_out"]


if __name__ == "__main__":
    key = jax.random.PRNGKey(0)
    pkey, xkey = jax.random.split(key)
    params = init_params(pkey)

    B, L = 2, L_MAX
    u = jax.random.normal(xkey, (B, L, DIM), jnp.float32)    # (batch, seq, dim)

    fwd = jax.jit(hyena_operator_forward)
    out = fwd(u, params)
    jax.block_until_ready(out)

    ref = reference_forward(u, params)
    err = float(jnp.max(jnp.abs(out - ref)))
    scale = float(jnp.max(jnp.abs(ref))) + 1.0
    if not err < 5e-2 * scale:
        raise AssertionError(f"mismatch vs reference: max abs err {err}")
    print("KERNEL_OK")
</pallas_src>

<mosaic_0001>
module attributes {stable_mosaic.version = 11 : i64} {
  func.func @_hyena_fused_kernel(%arg0: memref<2x256xf32, #tpu.memory_space<vmem>>, %arg1: memref<256x768xf32, #tpu.memory_space<vmem>>, %arg2: memref<1x768xf32, #tpu.memory_space<vmem>>, %arg3: memref<1x256x256xf32, #tpu.memory_space<vmem>>, %arg4: memref<1x1x256xf32, #tpu.memory_space<vmem>>, %arg5: memref<256x256xf32, #tpu.memory_space<vmem>>, %arg6: memref<1x256xf32, #tpu.memory_space<vmem>>, %arg7: memref<2x256xf32, #tpu.memory_space<vmem>>) attributes {dimension_semantics = [], scalar_prefetch = 0 : i64, scratch_operands = 0 : i64, tpu.core_type = #tpu.core_type<tc>} {
    %c0 = arith.constant 0 : index
    %c0_0 = arith.constant 0 : index
    %0 = vector.load %arg0[%c0, %c0_0] : memref<2x256xf32, #tpu.memory_space<vmem>>, vector<2x256xf32>
    %c0_1 = arith.constant 0 : index
    %c0_2 = arith.constant 0 : index
    %1 = vector.load %arg1[%c0_1, %c0_2] : memref<256x768xf32, #tpu.memory_space<vmem>>, vector<256x768xf32>
    %cst = arith.constant dense<0.000000e+00> : vector<2x768xf32>
    %2 = tpu.matmul %0, %1, %cst {dimension_numbers = #tpu.dot_dimension_numbers<[1], [0], [0], [1], [0, 0, 1, 1], [], []>} : vector<2x256xf32>, vector<256x768xf32>, vector<2x768xf32> -> vector<2x768xf32>
    %c0_3 = arith.constant 0 : index
    %c0_4 = arith.constant 0 : index
    %3 = vector.load %arg2[%c0_3, %c0_4] : memref<1x768xf32, #tpu.memory_space<vmem>>, vector<1x768xf32>
    %4 = vector.broadcast %3 : vector<1x768xf32> to vector<2x768xf32>
    %5 = arith.addf %2, %4 : vector<2x768xf32>
    %6 = vector.extract_strided_slice %5 {offsets = [0, 0], sizes = [2, 256], strides = [1, 1]} : vector<2x768xf32> to vector<2x256xf32>
    %7 = vector.extract_strided_slice %5 {offsets = [0, 512], sizes = [2, 256], strides = [1, 1]} : vector<2x768xf32> to vector<2x256xf32>
    %8 = vector.extract_strided_slice %5 {offsets = [0, 256], sizes = [2, 256], strides = [1, 1]} : vector<2x768xf32> to vector<2x256xf32>
    %9 = arith.mulf %7, %8 : vector<2x256xf32>
    %c0_5 = arith.constant 0 : index
    %c0_6 = arith.constant 0 : index
    %c0_7 = arith.constant 0 : index
    %10 = vector.load %arg3[%c0_5, %c0_6, %c0_7] : memref<1x256x256xf32, #tpu.memory_space<vmem>>, vector<1x256x256xf32>
    %11 = vector.shape_cast %10 : vector<1x256x256xf32> to vector<256x256xf32>
    %cst_8 = arith.constant dense<0.000000e+00> : vector<2x256xf32>
    %12 = tpu.matmul %9, %11, %cst_8 {dimension_numbers = #tpu.dot_dimension_numbers<[1], [0], [0], [1], [0, 0, 1, 1], [], []>} : vector<2x256xf32>, vector<256x256xf32>, vector<2x256xf32> -> vector<2x256xf32>
    %c0_9 = arith.constant 0 : index
    %c0_10 = arith.constant 0 : index
    %c0_11 = arith.constant 0 : index
    %13 = vector.load %arg4[%c0_9, %c0_10, %c0_11] : memref<1x1x256xf32, #tpu.memory_space<vmem>>, vector<1x1x256xf32>
    %14 = vector.shape_cast %13 : vector<1x1x256xf32> to vector<1x256xf32>
    %15 = vector.broadcast %14 : vector<1x256xf32> to vector<2x256xf32>
    %16 = arith.mulf %9, %15 : vector<2x256xf32>
    %17 = arith.addf %12, %16 : vector<2x256xf32>
    %18 = arith.mulf %17, %6 : vector<2x256xf32>
    %c0_12 = arith.constant 0 : index
    %c0_13 = arith.constant 0 : index
    %19 = vector.load %arg5[%c0_12, %c0_13] : memref<256x256xf32, #tpu.memory_space<vmem>>, vector<256x256xf32>
    %cst_14 = arith.constant dense<0.000000e+00> : vector<2x256xf32>
    %20 = tpu.matmul %18, %19, %cst_14 {dimension_numbers = #tpu.dot_dimension_numbers<[1], [0], [0], [1], [0, 0, 1, 1], [], []>} : vector<2x256xf32>, vector<256x256xf32>, vector<2x256xf32> -> vector<2x256xf32>
    %c0_15 = arith.constant 0 : index
    %c0_16 = arith.constant 0 : index
    %21 = vector.load %arg6[%c0_15, %c0_16] : memref<1x256xf32, #tpu.memory_space<vmem>>, vector<1x256xf32>
    %22 = vector.broadcast %21 : vector<1x256xf32> to vector<2x256xf32>
    %23 = arith.addf %20, %22 : vector<2x256xf32>
    %c0_17 = arith.constant 0 : index
    %c0_18 = arith.constant 0 : index
    %24 = vector.load %arg7[%c0_17, %c0_18] : memref<2x256xf32, #tpu.memory_space<vmem>>, vector<2x256xf32>
    tpu.vector_store %arg7[%c0_17, %c0_18], %23 {strides = array<i32>} : memref<2x256xf32, #tpu.memory_space<vmem>>, vector<2x256xf32>,
    return
  }
}

</mosaic_0001>

<llo_original>
// kernel: tile.8
$region0: #{tile.8}
  #allocation0 [shape = 's32[1]{0}', space=sflag, size = 0x4, scoped, tag = 'scoped memory for tile.8']
  %s0 = inlined_call_operand.vmem [shape: f32[8], index: 0, kind: input, shape index: {}]
  %s1 = inlined_call_operand.vmem [shape: f32[32,8], index: 1, kind: output, shape index: {}]
  // Predicated region
  $region2: #{tile.8} parent=0 // pred_check
    _
  $region3: #{tile.8} parent=0 // pred_check_branch
    %3 = sbr.rel (0) target = $region5
  $region4: #{tile.8} parent=0 // pred_region
    _
  $region5: #{tile.8} parent=0 // pred_fallthru
    _
  %v4 = vld [vmem:[%s0] ss:$0 sm:$0xff]
  %5 = vst [vmem:[%s1] sm:$0xff] %v4
  %s6 = scalar_lea.vmem %s1, 8
  %7 = vst [vmem:[%s6] sm:$0xff] %v4
  %s8 = scalar_lea.vmem %s1, 16
  %9 = vst [vmem:[%s8] sm:$0xff] %v4
  %s10 = scalar_lea.vmem %s1, 24
  %11 = vst [vmem:[%s10] sm:$0xff] %v4

// kernel: tile.9
$region0: #{tile.9}
  %s0 = inlined_call_operand.vmem [shape: f32[32,8], index: 0, kind: input, shape index: {}]
  %s1 = inlined_call_operand.vmem [shape: f32[1,256], index: 1, kind: output, shape index: {}]
  $region1: #{tile.9} parent=0
    #allocation0 [shape = 'u8[8192]{0}', space=vmem, size = 0x2000, scoped, tag = 'scoped mem for output reshape']
    %s2 = smov 3
    %v3 = vld [vmem:[%s0] ss:$16 sm:%s2]
    %vm4 = vcmask 64512
    %5 = vst.msk [vmem:[#allocation0] ss:$8 sm:$0x3] %vm4, %v3
    %s6 = scalar_lea.vmem %s0, 15
    %s7 = smov 3
    %v8 = vld [vmem:[%s6] ss:$16 sm:%s7]
    %9 = vrot.lane.b32.xlu0 %v8, 120
    %v10 = vpop.permute.xlu0 %9
    %vm11 = vcmask 1048512
    %12 = vst.msk [vmem:[#allocation0] ss:$8 sm:$0x3] %vm11, %v10
    %s13 = scalar_lea.vmem %s0, 14
    %s14 = smov 3
    %v15 = vld [vmem:[%s13] ss:$16 sm:%s14]
    %16 = vrot.lane.b32.xlu0 %v15, 112
    %v17 = vpop.permute.xlu0 %16
    %vm18 = vcmask 982912
    %19 = vst.msk [vmem:[#allocation0] ss:$8 sm:$0x3] %vm18, %v17
    %s20 = scalar_lea.vmem %s0, 13
    %s21 = smov 3
    %v22 = vld [vmem:[%s20] ss:$16 sm:%s21]
    %23 = vrot.lane.b32.xlu0 %v22, 104
    %v24 = vpop.permute.xlu0 %23
    %vm25 = vcmask 917312
    %26 = vst.msk [vmem:[#allocation0] ss:$8 sm:$0x3] %vm25, %v24
    %s27 = scalar_lea.vmem %s0, 12
    %s28 = smov 3
    %v29 = vld [vmem:[%s27] ss:$16 sm:%s28]
    %30 = vrot.lane.b32.xlu0 %v29, 96
    %v31 = vpop.permute.xlu0 %30
    %vm32 = vcmask 851712
    %33 = vst.msk [vmem:[#allocation0] ss:$8 sm:$0x3] %vm32, %v31
    %s34 = scalar_lea.vmem %s0, 11
    %s35 = smov 3
    %v36 = vld [vmem:[%s34] ss:$16 sm:%s35]
    %37 = vrot.lane.b32.xlu0 %v36, 88
    %v38 = vpop.permute.xlu0 %37
    %vm39 = vcmask 786112
    %40 = vst.msk [vmem:[#allocation0] ss:$8 sm:$0x3] %vm39, %v38
    %s41 = scalar_lea.vmem %s0, 10
    %s42 = smov 3
    %v43 = vld [vmem:[%s41] ss:$16 sm:%s42]
    %44 = vrot.lane.b32.xlu0 %v43, 80
    %v45 = vpop.permute.xlu0 %44
    %vm46 = vcmask 720512
    %47 = vst.msk [vmem:[#allocation0] ss:$8 sm:$0x3] %vm46, %v45
    %s48 = scalar_lea.vmem %s0, 9
    %s49 = smov 3
    %v50 = vld [vmem:[%s48] ss:$16 sm:%s49]
    %51 = vrot.lane.b32.xlu0 %v50, 72
    %v52 = vpop.permute.xlu0 %51
    %vm53 = vcmask 654912
    %54 = vst.msk [vmem:[#allocation0] ss:$8 sm:$0x3] %vm53, %v52
    %s55 = scalar_lea.vmem %s0, 8
    %s56 = smov 3
    %v57 = vld [vmem:[%s55] ss:$16 sm:%s56]
    %58 = vrot.lane.b32.xlu0 %v57, 64
    %v59 = vpop.permute.xlu0 %58
    %vm60 = vcmask 589312
    %61 = vst.msk [vmem:[#allocation0] ss:$8 sm:$0x3] %vm60, %v59
    %s62 = scalar_lea.vmem %s0, 7
    %s63 = smov 3
    %v64 = vld [vmem:[%s62] ss:$16 sm:%s63]
    %65 = vrot.lane.b32.xlu0 %v64, 56
    %v66 = vpop.permute.xlu0 %65
    %vm67 = vcmask 523712
    %68 = vst.msk [vmem:[#allocation0] ss:$8 sm:$0x3] %vm67, %v66
    %s69 = scalar_lea.vmem %s0, 6
    %s70 = smov 3
    %v71 = vld [vmem:[%s69] ss:$16 sm:%s70]
    %72 = vrot.lane.b32.xlu0 %v71, 48
    %v73 = vpop.permute.xlu0 %72
    %vm74 = vcmask 458112
    %75 = vst.msk [vmem:[#allocation0] ss:$8 sm:$0x3] %vm74, %v73
    %s76 = scalar_lea.vmem %s0, 5
    %s77 = smov 3
    %v78 = vld [vmem:[%s76] ss:$16 sm:%s77]
    %79 = vrot.lane.b32.xlu0 %v78, 40
    %v80 = vpop.permute.xlu0 %79
    %vm81 = vcmask 392512
    %82 = vst.msk [vmem:[#allocation0] ss:$8 sm:$0x3] %vm81, %v80
    %s83 = scalar_lea.vmem %s0, 4
    %s84 = smov 3
    %v85 = vld [vmem:[%s83] ss:$16 sm:%s84]
    %86 = vrot.lane.b32.xlu0 %v85, 32
    %v87 = vpop.permute.xlu0 %86
    %vm88 = vcmask 326912
    %89 = vst.msk [vmem:[#allocation0] ss:$8 sm:$0x3] %vm88, %v87
    %s90 = scalar_lea.vmem %s0, 3
    %s91 = smov 3
    %v92 = vld [vmem:[%s90] ss:$16 sm:%s91]
    %93 = vrot.lane.b32.xlu0 %v92, 24
    %v94 = vpop.permute.xlu0 %93
    %vm95 = vcmask 261312
    %96 = vst.msk [vmem:[#allocation0] ss:$8 sm:$0x3] %vm95, %v94
    %s97 = scalar_lea.vmem %s0, 2
    %s98 = smov 3
    %v99 = vld [vmem:[%s97] ss:$16 sm:%s98]
    %100 = vrot.lane.b32.xlu0 %v99, 16
    %v101 = vpop.permute.xlu0 %100
    %vm102 = vcmask 195712
    %103 = vst.msk [vmem:[#allocation0] ss:$8 sm:$0x3] %vm102, %v101
    %s104 = scalar_lea.vmem %s0, 1
    %s105 = smov 3
    %v106 = vld [vmem:[%s104] ss:$16 sm:%s105]
    %107 = vrot.lane.b32.xlu0 %v106, 8
    %v108 = vpop.permute.xlu0 %107
    %vm109 = vcmask 130112
    %110 = vst.msk [vmem:[#allocation0] ss:$8 sm:$0x3] %vm109, %v108
    %s112 = sshllo.u32 0, 1
    %v114 = vld [vmem:[#allocation0] sm:%s112]
    %s115 = sshllo.u32 0, 1
    %116 = vst [vmem:[%s1] sm:%s115] %v114
    %s117 = scalar_lea.vmem [#allocation0], 8
    %v118 = vld [vmem:[%s117] sm:%s112]
    %s119 = sshllo.u32 0, 1
    %s120 = scalar_lea.vmem %s1, 1
    %121 = vst [vmem:[%s120] sm:%s119] %v118

// kernel: hyena_operator_forward.1
$region0: #{hyena_operator_forward.1}
  #allocation0 [shape = 'u32[]', space=smem, size = 0x4, offset = 0x4, fixed_abs, tag = 'smem constant byte address 0x4 - core index']
  #allocation1 [shape = 'u32[144,128]{1,0:T(1,128)}', space=vmem, size = 0x12000, scoped, tag = 'internal scratch']
  %s0 = inlined_call_operand.vmem [shape: f32[2,256], index: 0, kind: input, shape index: {}]
  %s1 = inlined_call_operand.vmem [shape: f32[256,768], index: 1, kind: input, shape index: {}]
  %s2 = inlined_call_operand.vmem [shape: f32[1,768], index: 2, kind: input, shape index: {}]
  %s3 = inlined_call_operand.vmem [shape: f32[1,256,256], index: 3, kind: input, shape index: {}]
  %s4 = inlined_call_operand.vmem [shape: f32[1,1,256], index: 4, kind: input, shape index: {}]
  %s5 = inlined_call_operand.vmem [shape: f32[256,256], index: 5, kind: input, shape index: {}]
  %s6 = inlined_call_operand.vmem [shape: f32[1,256], index: 6, kind: input, shape index: {}]
  %s7 = inlined_call_operand.vmem [shape: f32[2,256], index: 7, kind: output, shape index: {}]
  %s8 = sld [smem:[#allocation0]]
  $region38: #{hyena_operator_forward.1} parent=0
    _
  %s10 = ssub.s32 1, %s8
  %s11 = scalar_select 0, %s10, %s8
  // Predicated region
  $region2: #{hyena_operator_forward.1} parent=0 // pred_check
    _
  $region3: #{hyena_operator_forward.1} parent=0 // pred_check_branch
    %13 = sbr.rel (0) target = $region5
  $region4: #{hyena_operator_forward.1} parent=0 // pred_region
    _
  $region5: #{hyena_operator_forward.1} parent=0 // pred_fallthru
    _
  // Predicated region
  $region6: #{hyena_operator_forward.1} parent=0 // pred_check
    _
  $region7: #{hyena_operator_forward.1} parent=0 // pred_check_branch
    %15 = sbr.rel (0) target = $region9
  $region8: #{hyena_operator_forward.1} parent=0 // pred_region
    _
  $region9: #{hyena_operator_forward.1} parent=0 // pred_fallthru
    _
  // Predicated region
  $region10: #{hyena_operator_forward.1} parent=0 // pred_check
    _
  $region11: #{hyena_operator_forward.1} parent=0 // pred_check_branch
    %17 = sbr.rel (0) target = $region13
  $region12: #{hyena_operator_forward.1} parent=0 // pred_region
    _
  $region13: #{hyena_operator_forward.1} parent=0 // pred_fallthru
    _
  // Predicated region
  $region14: #{hyena_operator_forward.1} parent=0 // pred_check
    _
  $region15: #{hyena_operator_forward.1} parent=0 // pred_check_branch
    %19 = sbr.rel (0) target = $region17
  $region16: #{hyena_operator_forward.1} parent=0 // pred_region
    _
  $region17: #{hyena_operator_forward.1} parent=0 // pred_fallthru
    _
  // Predicated region
  $region18: #{hyena_operator_forward.1} parent=0 // pred_check
    _
  $region19: #{hyena_operator_forward.1} parent=0 // pred_check_branch
    %21 = sbr.rel (0) target = $region21
  $region20: #{hyena_operator_forward.1} parent=0 // pred_region
    _
  $region21: #{hyena_operator_forward.1} parent=0 // pred_fallthru
    _
  // Predicated region
  $region22: #{hyena_operator_forward.1} parent=0 // pred_check
    _
  $region23: #{hyena_operator_forward.1} parent=0 // pred_check_branch
    %23 = sbr.rel (0) target = $region25
  $region24: #{hyena_operator_forward.1} parent=0 // pred_region
    _
  $region25: #{hyena_operator_forward.1} parent=0 // pred_fallthru
    _
  // Predicated region
  $region26: #{hyena_operator_forward.1} parent=0 // pred_check
    _
  $region27: #{hyena_operator_forward.1} parent=0 // pred_check_branch
    %25 = sbr.rel (0) target = $region29
  $region28: #{hyena_operator_forward.1} parent=0 // pred_region
    _
  $region29: #{hyena_operator_forward.1} parent=0 // pred_fallthru
    _
  %v26 = vld [vmem:[%s0] sm:$0xf]
  %v27 = vld [vmem:[%s1] sm:$0xff]
  %v28 = vld [vmem:[%s1 + $0x8] sm:$0xff]
  %v29 = vld [vmem:[%s1 + $0x10] sm:$0xff]
  %v30 = vld [vmem:[%s1 + $0x18] sm:$0xff]
  %v31 = vld [vmem:[%s1 + $0x20] sm:$0xff]
  %v32 = vld [vmem:[%s1 + $0x28] sm:$0xff]
  %v33 = vld [vmem:[%s1 + $0x30] sm:$0xff]
  %v34 = vld [vmem:[%s1 + $0x38] sm:$0xff]
  %v35 = vld [vmem:[%s1 + $0x40] sm:$0xff]
  %v36 = vld [vmem:[%s1 + $0x48] sm:$0xff]
  %v37 = vld [vmem:[%s1 + $0x50] sm:$0xff]
  %v38 = vld [vmem:[%s1 + $0x58] sm:$0xff]
  %v39 = vld [vmem:[%s1 + $0x60] sm:$0xff]
  %v40 = vld [vmem:[%s1 + $0x68] sm:$0xff]
  %v41 = vld [vmem:[%s1 + $0x70] sm:$0xff]
  %v42 = vld [vmem:[%s1 + $0x78] sm:$0xff]
  %v43 = vld [vmem:[%s1 + $0x80] sm:$0xff]
  %v44 = vld [vmem:[%s1 + $0x88] sm:$0xff]
  %v45 = vld [vmem:[%s1 + $0x90] sm:$0xff]
  %v46 = vld [vmem:[%s1 + $0x98] sm:$0xff]
  %v47 = vld [vmem:[%s1 + $0xa0] sm:$0xff]
  %v48 = vld [vmem:[%s1 + $0xa8] sm:$0xff]
  %v49 = vld [vmem:[%s1 + $0xb0] sm:$0xff]
  %v50 = vld [vmem:[%s1 + $0xb8] sm:$0xff]
  %v51 = vld [vmem:[%s1 + $0xc0] sm:$0xff]
  %v52 = vld [vmem:[%s1 + $0xc8] sm:$0xff]
  %v53 = vld [vmem:[%s1 + $0xd0] sm:$0xff]
  %v54 = vld [vmem:[%s1 + $0xd8] sm:$0xff]
  %v55 = vld [vmem:[%s1 + $0xe0] sm:$0xff]
  %v56 = vld [vmem:[%s1 + $0xe8] sm:$0xff]
  %v57 = vld [vmem:[%s1 + $0xf0] sm:$0xff]
  %v58 = vld [vmem:[%s1 + $0xf8] sm:$0xff]
  %v59 = vld [vmem:[%s1 + $0x100] sm:$0xff]
  %v60 = vld [vmem:[%s1 + $0x108] sm:$0xff]
  %v61 = vld [vmem:[%s1 + $0x110] sm:$0xff]
  %v62 = vld [vmem:[%s1 + $0x118] sm:$0xff]
  %v63 = vld [vmem:[%s1 + $0x120] sm:$0xff]
  %v64 = vld [vmem:[%s1 + $0x128] sm:$0xff]
  %v65 = vld [vmem:[%s1 + $0x130] sm:$0xff]
  %v66 = vld [vmem:[%s1 + $0x138] sm:$0xff]
  %v67 = vld [vmem:[%s1 + $0x140] sm:$0xff]
  %v68 = vld [vmem:[%s1 + $0x148] sm:$0xff]
  %v69 = vld [vmem:[%s1 + $0x150] sm:$0xff]
  %v70 = vld [vmem:[%s1 + $0x158] sm:$0xff]
  %v71 = vld [vmem:[%s1 + $0x160] sm:$0xff]
  %v72 = vld [vmem:[%s1 + $0x168] sm:$0xff]
  %v73 = vld [vmem:[%s1 + $0x170] sm:$0xff]
  %v74 = vld [vmem:[%s1 + $0x178] sm:$0xff]
  %v75 = vld [vmem:[%s1 + $0x180] sm:$0xff]
  %v76 = vld [vmem:[%s1 + $0x188] sm:$0xff]
  %v77 = vld [vmem:[%s1 + $0x190] sm:$0xff]
  %v78 = vld [vmem:[%s1 + $0x198] sm:$0xff]
  %v79 = vld [vmem:[%s1 + $0x1a0] sm:$0xff]
  %v80 = vld [vmem:[%s1 + $0x1a8] sm:$0xff]
  %v81 = vld [vmem:[%s1 + $0x1b0] sm:$0xff]
  %v82 = vld [vmem:[%s1 + $0x1b8] sm:$0xff]
  %v83 = vld [vmem:[%s1 + $0x1c0] sm:$0xff]
  %v84 = vld [vmem:[%s1 + $0x1c8] sm:$0xff]
  %v85 = vld [vmem:[%s1 + $0x1d0] sm:$0xff]
  %v86 = vld [vmem:[%s1 + $0x1d8] sm:$0xff]
  %v87 = vld [vmem:[%s1 + $0x1e0] sm:$0xff]
  %v88 = vld [vmem:[%s1 + $0x1e8] sm:$0xff]
  %v89 = vld [vmem:[%s1 + $0x1f0] sm:$0xff]
  %v90 = vld [vmem:[%s1 + $0x1f8] sm:$0xff]
  %v91 = vld [vmem:[%s1 + $0x200] sm:$0xff]
  %v92 = vld [vmem:[%s1 + $0x208] sm:$0xff]
  %v93 = vld [vmem:[%s1 + $0x210] sm:$0xff]
  %v94 = vld [vmem:[%s1 + $0x218] sm:$0xff]
  %v95 = vld [vmem:[%s1 + $0x220] sm:$0xff]
  %v96 = vld [vmem:[%s1 + $0x228] sm:$0xff]
  %v97 = vld [vmem:[%s1 + $0x230] sm:$0xff]
  %v98 = vld [vmem:[%s1 + $0x238] sm:$0xff]
  %v99 = vld [vmem:[%s1 + $0x240] sm:$0xff]
  %v100 = vld [vmem:[%s1 + $0x248] sm:$0xff]
  %v101 = vld [vmem:[%s1 + $0x250] sm:$0xff]
  %v102 = vld [vmem:[%s1 + $0x258] sm:$0xff]
  %v103 = vld [vmem:[%s1 + $0x260] sm:$0xff]
  %v104 = vld [vmem:[%s1 + $0x268] sm:$0xff]
  %v105 = vld [vmem:[%s1 + $0x270] sm:$0xff]
  %v106 = vld [vmem:[%s1 + $0x278] sm:$0xff]
  %v107 = vld [vmem:[%s1 + $0x280] sm:$0xff]
  %v108 = vld [vmem:[%s1 + $0x288] sm:$0xff]
  %v109 = vld [vmem:[%s1 + $0x290] sm:$0xff]
  %v110 = vld [vmem:[%s1 + $0x298] sm:$0xff]
  %v111 = vld [vmem:[%s1 + $0x2a0] sm:$0xff]
  %v112 = vld [vmem:[%s1 + $0x2a8] sm:$0xff]
  %v113 = vld [vmem:[%s1 + $0x2b0] sm:$0xff]
  %v114 = vld [vmem:[%s1 + $0x2b8] sm:$0xff]
  %v115 = vld [vmem:[%s1 + $0x2c0] sm:$0xff]
  %v116 = vld [vmem:[%s1 + $0x2c8] sm:$0xff]
  %v117 = vld [vmem:[%s1 + $0x2d0] sm:$0xff]
  %v118 = vld [vmem:[%s1 + $0x2d8] sm:$0xff]
  %v119 = vld [vmem:[%s1 + $0x2e0] sm:$0xff]
  %v120 = vld [vmem:[%s1 + $0x2e8] sm:$0xff]
  %v121 = vld [vmem:[%s1 + $0x2f0] sm:$0xff]
  %v122 = vld [vmem:[%s1 + $0x2f8] sm:$0xff]
  %v123 = vld [vmem:[%s1 + $0x300] sm:$0xff]
  %v124 = vld [vmem:[%s1 + $0x308] sm:$0xff]
  %v125 = vld [vmem:[%s1 + $0x310] sm:$0xff]
  %v126 = vld [vmem:[%s1 + $0x318] sm:$0xff]
  %v127 = vld [vmem:[%s1 + $0x320] sm:$0xff]
  %v128 = vld [vmem:[%s1 + $0x328] sm:$0xff]
  %v129 = vld [vmem:[%s1 + $0x330] sm:$0xff]
  %v130 = vld [vmem:[%s1 + $0x338] sm:$0xff]
  %v131 = vld [vmem:[%s1 + $0x340] sm:$0xff]
  %v132 = vld [vmem:[%s1 + $0x348] sm:$0xff]
  %v133 = vld [vmem:[%s1 + $0x350] sm:$0xff]
  %v134 = vld [vmem:[%s1 + $0x358] sm:$0xff]
  %v135 = vld [vmem:[%s1 + $0x360] sm:$0xff]
  %v136 = vld [vmem:[%s1 + $0x368] sm:$0xff]
  %v137 = vld [vmem:[%s1 + $0x370] sm:$0xff]
  %v138 = vld [vmem:[%s1 + $0x378] sm:$0xff]
  %v139 = vld [vmem:[%s1 + $0x380] sm:$0xff]
  %v140 = vld [vmem:[%s1 + $0x388] sm:$0xff]
  %v141 = vld [vmem:[%s1 + $0x390] sm:$0xff]
  %v142 = vld [vmem:[%s1 + $0x398] sm:$0xff]
  %v143 = vld [vmem:[%s1 + $0x3a0] sm:$0xff]
  %v144 = vld [vmem:[%s1 + $0x3a8] sm:$0xff]
  %v145 = vld [vmem:[%s1 + $0x3b0] sm:$0xff]
  %v146 = vld [vmem:[%s1 + $0x3b8] sm:$0xff]
  %v147 = vld [vmem:[%s1 + $0x3c0] sm:$0xff]
  %v148 = vld [vmem:[%s1 + $0x3c8] sm:$0xff]
  %v149 = vld [vmem:[%s1 + $0x3d0] sm:$0xff]
  %v150 = vld [vmem:[%s1 + $0x3d8] sm:$0xff]
  %v151 = vld [vmem:[%s1 + $0x3e0] sm:$0xff]
  %v152 = vld [vmem:[%s1 + $0x3e8] sm:$0xff]
  %v153 = vld [vmem:[%s1 + $0x3f0] sm:$0xff]
  %v154 = vld [vmem:[%s1 + $0x3f8] sm:$0xff]
  %v155 = vld [vmem:[%s1 + $0x400] sm:$0xff]
  %v156 = vld [vmem:[%s1 + $0x408] sm:$0xff]
  %v157 = vld [vmem:[%s1 + $0x410] sm:$0xff]
  %v158 = vld [vmem:[%s1 + $0x418] sm:$0xff]
  %v159 = vld [vmem:[%s1 + $0x420] sm:$0xff]
  %v160 = vld [vmem:[%s1 + $0x428] sm:$0xff]
  %v161 = vld [vmem:[%s1 + $0x430] sm:$0xff]
  %v162 = vld [vmem:[%s1 + $0x438] sm:$0xff]
  %v163 = vld [vmem:[%s1 + $0x440] sm:$0xff]
  %v164 = vld [vmem:[%s1 + $0x448] sm:$0xff]
  %v165 = vld [vmem:[%s1 + $0x450] sm:$0xff]
  %v166 = vld [vmem:[%s1 + $0x458] sm:$0xff]
  %v167 = vld [vmem:[%s1 + $0x460] sm:$0xff]
  %v168 = vld [vmem:[%s1 + $0x468] sm:$0xff]
  %v169 = vld [vmem:[%s1 + $0x470] sm:$0xff]
  %v170 = vld [vmem:[%s1 + $0x478] sm:$0xff]
  %v171 = vld [vmem:[%s1 + $0x480] sm:$0xff]
  %v172 = vld [vmem:[%s1 + $0x488] sm:$0xff]
  %v173 = vld [vmem:[%s1 + $0x490] sm:$0xff]
  %v174 = vld [vmem:[%s1 + $0x498] sm:$0xff]
  %v175 = vld [vmem:[%s1 + $0x4a0] sm:$0xff]
  %v176 = vld [vmem:[%s1 + $0x4a8] sm:$0xff]
  %v177 = vld [vmem:[%s1 + $0x4b0] sm:$0xff]
  %v178 = vld [vmem:[%s1 + $0x4b8] sm:$0xff]
  %v179 = vld [vmem:[%s1 + $0x4c0] sm:$0xff]
  %v180 = vld [vmem:[%s1 + $0x4c8] sm:$0xff]
  %v181 = vld [vmem:[%s1 + $0x4d0] sm:$0xff]
  %v182 = vld [vmem:[%s1 + $0x4d8] sm:$0xff]
  %v183 = vld [vmem:[%s1 + $0x4e0] sm:$0xff]
  %v184 = vld [vmem:[%s1 + $0x4e8] sm:$0xff]
  %v185 = vld [vmem:[%s1 + $0x4f0] sm:$0xff]
  %v186 = vld [vmem:[%s1 + $0x4f8] sm:$0xff]
  %v187 = vld [vmem:[%s1 + $0x500] sm:$0xff]
  %v188 = vld [vmem:[%s1 + $0x508] sm:$0xff]
  %v189 = vld [vmem:[%s1 + $0x510] sm:$0xff]
  %v190 = vld [vmem:[%s1 + $0x518] sm:$0xff]
  %v191 = vld [vmem:[%s1 + $0x520] sm:$0xff]
  %v192 = vld [vmem:[%s1 + $0x528] sm:$0xff]
  %v193 = vld [vmem:[%s1 + $0x530] sm:$0xff]
  %v194 = vld [vmem:[%s1 + $0x538] sm:$0xff]
  %v195 = vld [vmem:[%s1 + $0x540] sm:$0xff]
  %v196 = vld [vmem:[%s1 + $0x548] sm:$0xff]
  %v197 = vld [vmem:[%s1 + $0x550] sm:$0xff]
  %v198 = vld [vmem:[%s1 + $0x558] sm:$0xff]
  %v199 = vld [vmem:[%s1 + $0x560] sm:$0xff]
  %v200 = vld [vmem:[%s1 + $0x568] sm:$0xff]
  %v201 = vld [vmem:[%s1 + $0x570] sm:$0xff]
  %v202 = vld [vmem:[%s1 + $0x578] sm:$0xff]
  %v203 = vld [vmem:[%s1 + $0x580] sm:$0xff]
  %v204 = vld [vmem:[%s1 + $0x588] sm:$0xff]
  %v205 = vld [vmem:[%s1 + $0x590] sm:$0xff]
  %v206 = vld [vmem:[%s1 + $0x598] sm:$0xff]
  %v207 = vld [vmem:[%s1 + $0x5a0] sm:$0xff]
  %v208 = vld [vmem:[%s1 + $0x5a8] sm:$0xff]
  %v209 = vld [vmem:[%s1 + $0x5b0] sm:$0xff]
  %v210 = vld [vmem:[%s1 + $0x5b8] sm:$0xff]
  %v211 = vld [vmem:[%s1 + $0x5c0] sm:$0xff]
  %v212 = vld [vmem:[%s1 + $0x5c8] sm:$0xff]
  %v213 = vld [vmem:[%s1 + $0x5d0] sm:$0xff]
  %v214 = vld [vmem:[%s1 + $0x5d8] sm:$0xff]
  %v215 = vld [vmem:[%s1 + $0x5e0] sm:$0xff]
  %v216 = vld [vmem:[%s1 + $0x5e8] sm:$0xff]
  %v217 = vld [vmem:[%s1 + $0x5f0] sm:$0xff]
  %v218 = vld [vmem:[%s1 + $0x5f8] sm:$0xff]
  %v219 = vld [vmem:[%s2] sm:$0x3f]
  %v221 = vlaneseq
  %v222 = vshrl.u32 %v221, 7
  %v223 = vsub.s32 0, %v222
  %v224 = vrot.slane %v219, %v223
  %v225 = vlaneseq
  %v226 = vshrl.u32 %v225, 7
  %v227 = vsub.s32 1, %v226
  %v228 = vrot.slane %v219, %v227
  %v229 = vlaneseq
  %v230 = vshrl.u32 %v229, 7
  %v231 = vsub.s32 2, %v230
  %v232 = vrot.slane %v219, %v231
  %v233 = vlaneseq
  %v234 = vshrl.u32 %v233, 7
  %v235 = vsub.s32 3, %v234
  %v236 = vrot.slane %v219, %v235
  %v237 = vlaneseq
  %v238 = vshrl.u32 %v237, 7
  %v239 = vsub.s32 4, %v238
  %v240 = vrot.slane %v219, %v239
  %v241 = vlaneseq
  %v242 = vshrl.u32 %v241, 7
  %v243 = vsub.s32 5, %v242
  %v244 = vrot.slane %v219, %v243
  %v253 = vunpack.c.l.s4 1983009808
  %v254 = vunpack.c.0.s8 %v253
  %v255 = vlaneseq
  %v256 = vshrl.u32 %v255, 7
  %v257 = vsub.s32 %v254, %v256
  %v258 = vrot.slane %v26, %v257
  %v259 = vcombine.high %v258, %v258
  %262 = vmatprep.subr.mxu0 %v28
  %263 = vmatpush1.msra.mxu0 %v27
  %264 = vmatprep.subr.mxu0 %v34
  %265 = vmatpush1.msra.mxu0 %v33
  %266 = vmatprep.subr.mxu0 %v40
  %267 = vmatpush1.msra.mxu0 %v39
  %268 = vmatprep.subr.mxu0 %v46
  %269 = vmatpush1.msra.mxu0 %v45
  %270 = vmatprep.subr.mxu0 %v52
  %271 = vmatpush1.msra.mxu0 %v51
  %272 = vmatprep.subr.mxu0 %v58
  %273 = vmatpush1.msra.mxu0 %v57
  %274 = vmatprep.subr.mxu0 %v64
  %275 = vmatpush1.msra.mxu0 %v63
  %276 = vmatprep.subr.mxu0 %v70
  %277 = vmatpush1.msra.mxu0 %v69
  %278 = vmatprep.subr.mxu0 %v76
  %279 = vmatpush1.msra.mxu0 %v75
  %280 = vmatprep.subr.mxu0 %v82
  %281 = vmatpush1.msra.mxu0 %v81
  %282 = vmatprep.subr.mxu0 %v88
  %283 = vmatpush1.msra.mxu0 %v87
  %284 = vmatprep.subr.mxu0 %v94
  %285 = vmatpush1.msra.mxu0 %v93
  %286 = vmatprep.subr.mxu0 %v100
  %287 = vmatpush1.msra.mxu0 %v99
  %288 = vmatprep.subr.mxu0 %v106
  %289 = vmatpush1.msra.mxu0 %v105
  %290 = vmatprep.subr.mxu0 %v112
  %291 = vmatpush1.msra.mxu0 %v111
  %292 = vmatprep.subr.mxu0 %v118
  %293 = vmatpush1.msra.mxu0 %v117
  %294 = vmatprep.subr.mxu0 %v124
  %295 = vmatpush1.msra.mxu0 %v123
  %296 = vmatprep.subr.mxu0 %v130
  %297 = vmatpush1.msra.mxu0 %v129
  %298 = vmatprep.subr.mxu0 %v136
  %299 = vmatpush1.msra.mxu0 %v135
  %300 = vmatprep.subr.mxu0 %v142
  %301 = vmatpush1.msra.mxu0 %v141
  %302 = vmatprep.subr.mxu0 %v148
  %303 = vmatpush1.msra.mxu0 %v147
  %304 = vmatprep.subr.mxu0 %v154
  %305 = vmatpush1.msra.mxu0 %v153
  %306 = vmatprep.subr.mxu0 %v160
  %307 = vmatpush1.msra.mxu0 %v159
  %308 = vmatprep.subr.mxu0 %v166
  %309 = vmatpush1.msra.mxu0 %v165
  %310 = vmatprep.subr.mxu0 %v172
  %311 = vmatpush1.msra.mxu0 %v171
  %312 = vmatprep.subr.mxu0 %v178
  %313 = vmatpush1.msra.mxu0 %v177
  %314 = vmatprep.subr.mxu0 %v184
  %315 = vmatpush1.msra.mxu0 %v183
  %316 = vmatprep.subr.mxu0 %v190
  %317 = vmatpush1.msra.mxu0 %v189
  %318 = vmatprep.subr.mxu0 %v196
  %319 = vmatpush1.msra.mxu0 %v195
  %320 = vmatprep.subr.mxu0 %v202
  %321 = vmatpush1.msra.mxu0 %v201
  %322 = vmatprep.subr.mxu0 %v208
  %323 = vmatpush1.msra.mxu0 %v207
  %324 = vmatprep.subr.mxu0 %v214
  %325 = vmatpush1.msra.mxu0 %v213
  %326 = vmatprep.mubr.f32.mxu0 %v259
  %327 = vmatmul.mubr.f32.gmra.mrb[0].mxu0 %v258
  %v328 = vpop.f32.mrb[0].mxu0
  %v329 = vadd.f32 %v224, %v328
  %v330 = vpop.f32.mrb[0].mxu0
  %v331 = vadd.f32 %v228, %v330
  %332 = vdwg.mxu0
  %333 = vmatprep.subr.mxu0 %v30
  %334 = vmatpush1.msra.mxu0 %v29
  %335 = vmatprep.subr.mxu0 %v36
  %336 = vmatpush1.msra.mxu0 %v35
  %337 = vmatprep.subr.mxu0 %v42
  %338 = vmatpush1.msra.mxu0 %v41
  %339 = vmatprep.subr.mxu0 %v48
  %340 = vmatpush1.msra.mxu0 %v47
  %341 = vmatprep.subr.mxu0 %v54
  %342 = vmatpush1.msra.mxu0 %v53
  %343 = vmatprep.subr.mxu0 %v60
  %344 = vmatpush1.msra.mxu0 %v59
  %345 = vmatprep.subr.mxu0 %v66
  %346 = vmatpush1.msra.mxu0 %v65
  %347 = vmatprep.subr.mxu0 %v72
  %348 = vmatpush1.msra.mxu0 %v71
  %349 = vmatprep.subr.mxu0 %v78
  %350 = vmatpush1.msra.mxu0 %v77
  %351 = vmatprep.subr.mxu0 %v84
  %352 = vmatpush1.msra.mxu0 %v83
  %353 = vmatprep.subr.mxu0 %v90
  %354 = vmatpush1.msra.mxu0 %v89
  %355 = vmatprep.subr.mxu0 %v96
  %356 = vmatpush1.msra.mxu0 %v95
  %357 = vmatprep.subr.mxu0 %v102
  %358 = vmatpush1.msra.mxu0 %v101
  %359 = vmatprep.subr.mxu0 %v108
  %360 = vmatpush1.msra.mxu0 %v107
  %361 = vmatprep.subr.mxu0 %v114
  %362 = vmatpush1.msra.mxu0 %v113
  %363 = vmatprep.subr.mxu0 %v120
  %364 = vmatpush1.msra.mxu0 %v119
  %365 = vmatprep.subr.mxu0 %v126
  %366 = vmatpush1.msra.mxu0 %v125
  %367 = vmatprep.subr.mxu0 %v132
  %368 = vmatpush1.msra.mxu0 %v131
  %369 = vmatprep.subr.mxu0 %v138
  %370 = vmatpush1.msra.mxu0 %v137
  %371 = vmatprep.subr.mxu0 %v144
  %372 = vmatpush1.msra.mxu0 %v143
  %373 = vmatprep.subr.mxu0 %v150
  %374 = vmatpush1.msra.mxu0 %v149
  %375 = vmatprep.subr.mxu0 %v156
  %376 = vmatpush1.msra.mxu0 %v155
  %377 = vmatprep.subr.mxu0 %v162
  %378 = vmatpush1.msra.mxu0 %v161
  %379 = vmatprep.subr.mxu0 %v168
  %380 = vmatpush1.msra.mxu0 %v167
  %381 = vmatprep.subr.mxu0 %v174
  %382 = vmatpush1.msra.mxu0 %v173
  %383 = vmatprep.subr.mxu0 %v180
  %384 = vmatpush1.msra.mxu0 %v179
  %385 = vmatprep.subr.mxu0 %v186
  %386 = vmatpush1.msra.mxu0 %v185
  %387 = vmatprep.subr.mxu0 %v192
  %388 = vmatpush1.msra.mxu0 %v191
  %389 = vmatprep.subr.mxu0 %v198
  %390 = vmatpush1.msra.mxu0 %v197
  %391 = vmatprep.subr.mxu0 %v204
  %392 = vmatpush1.msra.mxu0 %v203
  %393 = vmatprep.subr.mxu0 %v210
  %394 = vmatpush1.msra.mxu0 %v209
  %395 = vmatprep.subr.mxu0 %v216
  %396 = vmatpush1.msra.mxu0 %v215
  %397 = vmatprep.mubr.f32.mxu0 %v259
  %398 = vmatmul.mubr.f32.gmra.mrb[0].mxu0 %v258
  %v399 = vpop.f32.mrb[0].mxu0
  %v400 = vadd.f32 %v232, %v399
  %v401 = vpop.f32.mrb[0].mxu0
  %v402 = vadd.f32 %v236, %v401
  %403 = vdwg.mxu0
  %404 = vmatprep.subr.mxu0 %v32
  %405 = vmatpush1.msra.mxu0 %v31
  %406 = vmatprep.subr.mxu0 %v38
  %407 = vmatpush1.msra.mxu0 %v37
  %408 = vmatprep.subr.mxu0 %v44
  %409 = vmatpush1.msra.mxu0 %v43
  %410 = vmatprep.subr.mxu0 %v50
  %411 = vmatpush1.msra.mxu0 %v49
  %412 = vmatprep.subr.mxu0 %v56
  %413 = vmatpush1.msra.mxu0 %v55
  %414 = vmatprep.subr.mxu0 %v62
  %415 = vmatpush1.msra.mxu0 %v61
  %416 = vmatprep.subr.mxu0 %v68
  %417 = vmatpush1.msra.mxu0 %v67
  %418 = vmatprep.subr.mxu0 %v74
  %419 = vmatpush1.msra.mxu0 %v73
  %420 = vmatprep.subr.mxu0 %v80
  %421 = vmatpush1.msra.mxu0 %v79
  %422 = vmatprep.subr.mxu0 %v86
  %423 = vmatpush1.msra.mxu0 %v85
  %424 = vmatprep.subr.mxu0 %v92
  %425 = vmatpush1.msra.mxu0 %v91
  %426 = vmatprep.subr.mxu0 %v98
  %427 = vmatpush1.msra.mxu0 %v97
  %428 = vmatprep.subr.mxu0 %v104
  %429 = vmatpush1.msra.mxu0 %v103
  %430 = vmatprep.subr.mxu0 %v110
  %431 = vmatpush1.msra.mxu0 %v109
  %432 = vmatprep.subr.mxu0 %v116
  %433 = vmatpush1.msra.mxu0 %v115
  %434 = vmatprep.subr.mxu0 %v122
  %435 = vmatpush1.msra.mxu0 %v121
  %436 = vmatprep.subr.mxu0 %v128
  %437 = vmatpush1.msra.mxu0 %v127
  %438 = vmatprep.subr.mxu0 %v134
  %439 = vmatpush1.msra.mxu0 %v133
  %440 = vmatprep.subr.mxu0 %v140
  %441 = vmatpush1.msra.mxu0 %v139
  %442 = vmatprep.subr.mxu0 %v146
  %443 = vmatpush1.msra.mxu0 %v145
  %444 = vmatprep.subr.mxu0 %v152
  %445 = vmatpush1.msra.mxu0 %v151
  %446 = vmatprep.subr.mxu0 %v158
  %447 = vmatpush1.msra.mxu0 %v157
  %448 = vmatprep.subr.mxu0 %v164
  %449 = vmatpush1.msra.mxu0 %v163
  %450 = vmatprep.subr.mxu0 %v170
  %451 = vmatpush1.msra.mxu0 %v169
  %452 = vmatprep.subr.mxu0 %v176
  %453 = vmatpush1.msra.mxu0 %v175
  %454 = vmatprep.subr.mxu0 %v182
  %455 = vmatpush1.msra.mxu0 %v181
  %456 = vmatprep.subr.mxu0 %v188
  %457 = vmatpush1.msra.mxu0 %v187
  %458 = vmatprep.subr.mxu0 %v194
  %459 = vmatpush1.msra.mxu0 %v193
  %460 = vmatprep.subr.mxu0 %v200
  %461 = vmatpush1.msra.mxu0 %v199
  %462 = vmatprep.subr.mxu0 %v206
  %463 = vmatpush1.msra.mxu0 %v205
  %464 = vmatprep.subr.mxu0 %v212
  %465 = vmatpush1.msra.mxu0 %v211
  %466 = vmatprep.subr.mxu0 %v218
  %467 = vmatpush1.msra.mxu0 %v217
  %468 = vmatprep.mubr.f32.mxu0 %v259
  %469 = vmatmul.mubr.f32.gmra.mrb[0].mxu0 %v258
  %v470 = vpop.f32.mrb[0].mxu0
  %v471 = vadd.f32 %v240, %v470
  %v472 = vpop.f32.mrb[0].mxu0
  %v473 = vadd.f32 %v244, %v472
  %474 = vdwg.mxu0
  %v475 = vmul.f32 %v471, %v400
  %v476 = vmul.f32 %v473, %v402
  %v477 = vld [vmem:[%s3] sm:$0xff]
  %v478 = vld [vmem:[%s3 + $0x8] sm:$0xff]
  %v479 = vld [vmem:[%s3 + $0x10] sm:$0xff]
  %v480 = vld [vmem:[%s3 + $0x18] sm:$0xff]
  %v481 = vld [vmem:[%s3 + $0x20] sm:$0xff]
  %v482 = vld [vmem:[%s3 + $0x28] sm:$0xff]
  %v483 = vld [vmem:[%s3 + $0x30] sm:$0xff]
  %v484 = vld [vmem:[%s3 + $0x38] sm:$0xff]
  %v485 = vld [vmem:[%s3 + $0x40] sm:$0xff]
  %v486 = vld [vmem:[%s3 + $0x48] sm:$0xff]
  %v487 = vld [vmem:[%s3 + $0x50] sm:$0xff]
  %v488 = vld [vmem:[%s3 + $0x58] sm:$0xff]
  %v489 = vld [vmem:[%s3 + $0x60] sm:$0xff]
  %v490 = vld [vmem:[%s3 + $0x68] sm:$0xff]
  %v491 = vld [vmem:[%s3 + $0x70] sm:$0xff]
  %v492 = vld [vmem:[%s3 + $0x78] sm:$0xff]
  %v493 = vld [vmem:[%s3 + $0x80] sm:$0xff]
  %v494 = vld [vmem:[%s3 + $0x88] sm:$0xff]
  %v495 = vld [vmem:[%s3 + $0x90] sm:$0xff]
  %v496 = vld [vmem:[%s3 + $0x98] sm:$0xff]
  %v497 = vld [vmem:[%s3 + $0xa0] sm:$0xff]
  %v498 = vld [vmem:[%s3 + $0xa8] sm:$0xff]
  %v499 = vld [vmem:[%s3 + $0xb0] sm:$0xff]
  %v500 = vld [vmem:[%s3 + $0xb8] sm:$0xff]
  %v501 = vld [vmem:[%s3 + $0xc0] sm:$0xff]
  %v502 = vld [vmem:[%s3 + $0xc8] sm:$0xff]
  %v503 = vld [vmem:[%s3 + $0xd0] sm:$0xff]
  %v504 = vld [vmem:[%s3 + $0xd8] sm:$0xff]
  %v505 = vld [vmem:[%s3 + $0xe0] sm:$0xff]
  %v506 = vld [vmem:[%s3 + $0xe8] sm:$0xff]
  %v507 = vld [vmem:[%s3 + $0xf0] sm:$0xff]
  %v508 = vld [vmem:[%s3 + $0xf8] sm:$0xff]
  %v509 = vld [vmem:[%s3 + $0x100] sm:$0xff]
  %v510 = vld [vmem:[%s3 + $0x108] sm:$0xff]
  %v511 = vld [vmem:[%s3 + $0x110] sm:$0xff]
  %v512 = vld [vmem:[%s3 + $0x118] sm:$0xff]
  %v513 = vld [vmem:[%s3 + $0x120] sm:$0xff]
  %v514 = vld [vmem:[%s3 + $0x128] sm:$0xff]
  %v515 = vld [vmem:[%s3 + $0x130] sm:$0xff]
  %v516 = vld [vmem:[%s3 + $0x138] sm:$0xff]
  %v517 = vld [vmem:[%s3 + $0x140] sm:$0xff]
  %v518 = vld [vmem:[%s3 + $0x148] sm:$0xff]
  %v519 = vld [vmem:[%s3 + $0x150] sm:$0xff]
  %v520 = vld [vmem:[%s3 + $0x158] sm:$0xff]
  %v521 = vld [vmem:[%s3 + $0x160] sm:$0xff]
  %v522 = vld [vmem:[%s3 + $0x168] sm:$0xff]
  %v523 = vld [vmem:[%s3 + $0x170] sm:$0xff]
  %v524 = vld [vmem:[%s3 + $0x178] sm:$0xff]
  %v525 = vld [vmem:[%s3 + $0x180] sm:$0xff]
  %v526 = vld [vmem:[%s3 + $0x188] sm:$0xff]
  %v527 = vld [vmem:[%s3 + $0x190] sm:$0xff]
  %v528 = vld [vmem:[%s3 + $0x198] sm:$0xff]
  %v529 = vld [vmem:[%s3 + $0x1a0] sm:$0xff]
  %v530 = vld [vmem:[%s3 + $0x1a8] sm:$0xff]
  %v531 = vld [vmem:[%s3 + $0x1b0] sm:$0xff]
  %v532 = vld [vmem:[%s3 + $0x1b8] sm:$0xff]
  %v533 = vld [vmem:[%s3 + $0x1c0] sm:$0xff]
  %v534 = vld [vmem:[%s3 + $0x1c8] sm:$0xff]
  %v535 = vld [vmem:[%s3 + $0x1d0] sm:$0xff]
  %v536 = vld [vmem:[%s3 + $0x1d8] sm:$0xff]
  %v537 = vld [vmem:[%s3 + $0x1e0] sm:$0xff]
  %v538 = vld [vmem:[%s3 + $0x1e8] sm:$0xff]
  %v539 = vld [vmem:[%s3 + $0x1f0] sm:$0xff]
  %v540 = vld [vmem:[%s3 + $0x1f8] sm:$0xff]
  %v541 = vld [vmem:[%s4] sm:$0x3]
  %v543 = vlaneseq
  %v544 = vshrl.u32 %v543, 7
  %v545 = vsub.s32 0, %v544
  %v546 = vrot.slane %v541, %v545
  %v547 = vlaneseq
  %v548 = vshrl.u32 %v547, 7
  %v549 = vsub.s32 1, %v548
  %v550 = vrot.slane %v541, %v549
  %v553 = vmul.f32 %v475, %v546
  %v554 = vmul.f32 %v476, %v550
  %555 = vmatprep.subr.mxu0 %v478
  %556 = vmatpush1.msra.mxu0 %v477
  %557 = vmatprep.subr.mxu0 %v480
  %558 = vmatpush1.msra.mxu0 %v479
  %559 = vmatprep.subr.mxu0 %v482
  %560 = vmatpush1.msra.mxu0 %v481
  %561 = vmatprep.subr.mxu0 %v484
  %562 = vmatpush1.msra.mxu0 %v483
  %563 = vmatprep.subr.mxu0 %v486
  %564 = vmatpush1.msra.mxu0 %v485
  %565 = vmatprep.subr.mxu0 %v488
  %566 = vmatpush1.msra.mxu0 %v487
  %567 = vmatprep.subr.mxu0 %v490
  %568 = vmatpush1.msra.mxu0 %v489
  %569 = vmatprep.subr.mxu0 %v492
  %570 = vmatpush1.msra.mxu0 %v491
  %571 = vmatprep.subr.mxu0 %v494
  %572 = vmatpush1.msra.mxu0 %v493
  %573 = vmatprep.subr.mxu0 %v496
  %574 = vmatpush1.msra.mxu0 %v495
  %575 = vmatprep.subr.mxu0 %v498
  %576 = vmatpush1.msra.mxu0 %v497
  %577 = vmatprep.subr.mxu0 %v500
  %578 = vmatpush1.msra.mxu0 %v499
  %579 = vmatprep.subr.mxu0 %v502
  %580 = vmatpush1.msra.mxu0 %v501
  %581 = vmatprep.subr.mxu0 %v504
  %582 = vmatpush1.msra.mxu0 %v503
  %583 = vmatprep.subr.mxu0 %v506
  %584 = vmatpush1.msra.mxu0 %v505
  %585 = vmatprep.subr.mxu0 %v508
  %586 = vmatpush1.msra.mxu0 %v507
  %587 = vmatprep.subr.mxu0 %v510
  %588 = vmatpush1.msra.mxu0 %v509
  %589 = vmatprep.subr.mxu0 %v512
  %590 = vmatpush1.msra.mxu0 %v511
  %591 = vmatprep.subr.mxu0 %v514
  %592 = vmatpush1.msra.mxu0 %v513
  %593 = vmatprep.subr.mxu0 %v516
  %594 = vmatpush1.msra.mxu0 %v515
  %595 = vmatprep.subr.mxu0 %v518
  %596 = vmatpush1.msra.mxu0 %v517
  %597 = vmatprep.subr.mxu0 %v520
  %598 = vmatpush1.msra.mxu0 %v519
  %599 = vmatprep.subr.mxu0 %v522
  %600 = vmatpush1.msra.mxu0 %v521
  %601 = vmatprep.subr.mxu0 %v524
  %602 = vmatpush1.msra.mxu0 %v523
  %603 = vmatprep.subr.mxu0 %v526
  %604 = vmatpush1.msra.mxu0 %v525
  %605 = vmatprep.subr.mxu0 %v528
  %606 = vmatpush1.msra.mxu0 %v527
  %607 = vmatprep.subr.mxu0 %v530
  %608 = vmatpush1.msra.mxu0 %v529
  %609 = vmatprep.subr.mxu0 %v532
  %610 = vmatpush1.msra.mxu0 %v531
  %611 = vmatprep.subr.mxu0 %v534
  %612 = vmatpush1.msra.mxu0 %v533
  %613 = vmatprep.subr.mxu0 %v536
  %614 = vmatpush1.msra.mxu0 %v535
  %615 = vmatprep.subr.mxu0 %v538
  %616 = vmatpush1.msra.mxu0 %v537
  %617 = vmatprep.subr.mxu0 %v540
  %618 = vmatpush1.msra.mxu0 %v539
  %619 = vmatprep.mubr.f32.mxu0 %v476
  %620 = vmatmul.mubr.f32.gmra.mrb[0].mxu0 %v475
  %v621 = vpop.f32.mrb[0].mxu0
  %v622 = vadd.f32 %v553, %v621
  %v623 = vpop.f32.mrb[0].mxu0
  %v624 = vadd.f32 %v554, %v623
  %625 = vdwg.mxu0
  %v626 = vmul.f32 %v622, %v329
  %v627 = vmul.f32 %v624, %v331
  %v628 = vld [vmem:[%s5] sm:$0xff]
  %v629 = vld [vmem:[%s5 + $0x8] sm:$0xff]
  %v630 = vld [vmem:[%s5 + $0x10] sm:$0xff]
  %v631 = vld [vmem:[%s5 + $0x18] sm:$0xff]
  %v632 = vld [vmem:[%s5 + $0x20] sm:$0xff]
  %v633 = vld [vmem:[%s5 + $0x28] sm:$0xff]
  %v634 = vld [vmem:[%s5 + $0x30] sm:$0xff]
  %v635 = vld [vmem:[%s5 + $0x38] sm:$0xff]
  %v636 = vld [vmem:[%s5 + $0x40] sm:$0xff]
  %v637 = vld [vmem:[%s5 + $0x48] sm:$0xff]
  %v638 = vld [vmem:[%s5 + $0x50] sm:$0xff]
  %v639 = vld [vmem:[%s5 + $0x58] sm:$0xff]
  %v640 = vld [vmem:[%s5 + $0x60] sm:$0xff]
  %v641 = vld [vmem:[%s5 + $0x68] sm:$0xff]
  %v642 = vld [vmem:[%s5 + $0x70] sm:$0xff]
  %v643 = vld [vmem:[%s5 + $0x78] sm:$0xff]
  %v644 = vld [vmem:[%s5 + $0x80] sm:$0xff]
  %v645 = vld [vmem:[%s5 + $0x88] sm:$0xff]
  %v646 = vld [vmem:[%s5 + $0x90] sm:$0xff]
  %v647 = vld [vmem:[%s5 + $0x98] sm:$0xff]
  %v648 = vld [vmem:[%s5 + $0xa0] sm:$0xff]
  %v649 = vld [vmem:[%s5 + $0xa8] sm:$0xff]
  %v650 = vld [vmem:[%s5 + $0xb0] sm:$0xff]
  %v651 = vld [vmem:[%s5 + $0xb8] sm:$0xff]
  %v652 = vld [vmem:[%s5 + $0xc0] sm:$0xff]
  %v653 = vld [vmem:[%s5 + $0xc8] sm:$0xff]
  %v654 = vld [vmem:[%s5 + $0xd0] sm:$0xff]
  %v655 = vld [vmem:[%s5 + $0xd8] sm:$0xff]
  %v656 = vld [vmem:[%s5 + $0xe0] sm:$0xff]
  %v657 = vld [vmem:[%s5 + $0xe8] sm:$0xff]
  %v658 = vld [vmem:[%s5 + $0xf0] sm:$0xff]
  %v659 = vld [vmem:[%s5 + $0xf8] sm:$0xff]
  %v660 = vld [vmem:[%s5 + $0x100] sm:$0xff]
  %v661 = vld [vmem:[%s5 + $0x108] sm:$0xff]
  %v662 = vld [vmem:[%s5 + $0x110] sm:$0xff]
  %v663 = vld [vmem:[%s5 + $0x118] sm:$0xff]
  %v664 = vld [vmem:[%s5 + $0x120] sm:$0xff]
  %v665 = vld [vmem:[%s5 + $0x128] sm:$0xff]
  %v666 = vld [vmem:[%s5 + $0x130] sm:$0xff]
  %v667 = vld [vmem:[%s5 + $0x138] sm:$0xff]
  %v668 = vld [vmem:[%s5 + $0x140] sm:$0xff]
  %v669 = vld [vmem:[%s5 + $0x148] sm:$0xff]
  %v670 = vld [vmem:[%s5 + $0x150] sm:$0xff]
  %v671 = vld [vmem:[%s5 + $0x158] sm:$0xff]
  %v672 = vld [vmem:[%s5 + $0x160] sm:$0xff]
  %v673 = vld [vmem:[%s5 + $0x168] sm:$0xff]
  %v674 = vld [vmem:[%s5 + $0x170] sm:$0xff]
  %v675 = vld [vmem:[%s5 + $0x178] sm:$0xff]
  %v676 = vld [vmem:[%s5 + $0x180] sm:$0xff]
  %v677 = vld [vmem:[%s5 + $0x188] sm:$0xff]
  %v678 = vld [vmem:[%s5 + $0x190] sm:$0xff]
  %v679 = vld [vmem:[%s5 + $0x198] sm:$0xff]
  %v680 = vld [vmem:[%s5 + $0x1a0] sm:$0xff]
  %v681 = vld [vmem:[%s5 + $0x1a8] sm:$0xff]
  %v682 = vld [vmem:[%s5 + $0x1b0] sm:$0xff]
  %v683 = vld [vmem:[%s5 + $0x1b8] sm:$0xff]
  %v684 = vld [vmem:[%s5 + $0x1c0] sm:$0xff]
  %v685 = vld [vmem:[%s5 + $0x1c8] sm:$0xff]
  %v686 = vld [vmem:[%s5 + $0x1d0] sm:$0xff]
  %v687 = vld [vmem:[%s5 + $0x1d8] sm:$0xff]
  %v688 = vld [vmem:[%s5 + $0x1e0] sm:$0xff]
  %v689 = vld [vmem:[%s5 + $0x1e8] sm:$0xff]
  %v690 = vld [vmem:[%s5 + $0x1f0] sm:$0xff]
  %v691 = vld [vmem:[%s5 + $0x1f8] sm:$0xff]
  %v692 = vld [vmem:[%s6] sm:$0x3]
  %v694 = vlaneseq
  %v695 = vshrl.u32 %v694, 7
  %v696 = vsub.s32 0, %v695
  %v697 = vrot.slane %v692, %v696
  %v698 = vlaneseq
  %v699 = vshrl.u32 %v698, 7
  %v700 = vsub.s32 1, %v699
  %v701 = vrot.slane %v692, %v700
  %704 = vmatprep.subr.mxu0 %v629
  %705 = vmatpush1.msra.mxu0 %v628
  %706 = vmatprep.subr.mxu0 %v631
  %707 = vmatpush1.msra.mxu0 %v630
  %708 = vmatprep.subr.mxu0 %v633
  %709 = vmatpush1.msra.mxu0 %v632
  %710 = vmatprep.subr.mxu0 %v635
  %711 = vmatpush1.msra.mxu0 %v634
  %712 = vmatprep.subr.mxu0 %v637
  %713 = vmatpush1.msra.mxu0 %v636
  %714 = vmatprep.subr.mxu0 %v639
  %715 = vmatpush1.msra.mxu0 %v638
  %716 = vmatprep.subr.mxu0 %v641
  %717 = vmatpush1.msra.mxu0 %v640
  %718 = vmatprep.subr.mxu0 %v643
  %719 = vmatpush1.msra.mxu0 %v642
  %720 = vmatprep.subr.mxu0 %v645
  %721 = vmatpush1.msra.mxu0 %v644
  %722 = vmatprep.subr.mxu0 %v647
  %723 = vmatpush1.msra.mxu0 %v646
  %724 = vmatprep.subr.mxu0 %v649
  %725 = vmatpush1.msra.mxu0 %v648
  %726 = vmatprep.subr.mxu0 %v651
  %727 = vmatpush1.msra.mxu0 %v650
  %728 = vmatprep.subr.mxu0 %v653
  %729 = vmatpush1.msra.mxu0 %v652
  %730 = vmatprep.subr.mxu0 %v655
  %731 = vmatpush1.msra.mxu0 %v654
  %732 = vmatprep.subr.mxu0 %v657
  %733 = vmatpush1.msra.mxu0 %v656
  %734 = vmatprep.subr.mxu0 %v659
  %735 = vmatpush1.msra.mxu0 %v658
  %736 = vmatprep.subr.mxu0 %v661
  %737 = vmatpush1.msra.mxu0 %v660
  %738 = vmatprep.subr.mxu0 %v663
  %739 = vmatpush1.msra.mxu0 %v662
  %740 = vmatprep.subr.mxu0 %v665
  %741 = vmatpush1.msra.mxu0 %v664
  %742 = vmatprep.subr.mxu0 %v667
  %743 = vmatpush1.msra.mxu0 %v666
  %744 = vmatprep.subr.mxu0 %v669
  %745 = vmatpush1.msra.mxu0 %v668
  %746 = vmatprep.subr.mxu0 %v671
  %747 = vmatpush1.msra.mxu0 %v670
  %748 = vmatprep.subr.mxu0 %v673
  %749 = vmatpush1.msra.mxu0 %v672
  %750 = vmatprep.subr.mxu0 %v675
  %751 = vmatpush1.msra.mxu0 %v674
  %752 = vmatprep.subr.mxu0 %v677
  %753 = vmatpush1.msra.mxu0 %v676
  %754 = vmatprep.subr.mxu0 %v679
  %755 = vmatpush1.msra.mxu0 %v678
  %756 = vmatprep.subr.mxu0 %v681
  %757 = vmatpush1.msra.mxu0 %v680
  %758 = vmatprep.subr.mxu0 %v683
  %759 = vmatpush1.msra.mxu0 %v682
  %760 = vmatprep.subr.mxu0 %v685
  %761 = vmatpush1.msra.mxu0 %v684
  %762 = vmatprep.subr.mxu0 %v687
  %763 = vmatpush1.msra.mxu0 %v686
  %764 = vmatprep.subr.mxu0 %v689
  %765 = vmatpush1.msra.mxu0 %v688
  %766 = vmatprep.subr.mxu0 %v691
  %767 = vmatpush1.msra.mxu0 %v690
  %768 = vmatprep.mubr.f32.mxu0 %v627
  %769 = vmatmul.mubr.f32.gmra.mrb[0].mxu0 %v626
  %v770 = vpop.f32.mrb[0].mxu0
  %v771 = vadd.f32 %v697, %v770
  %v772 = vpop.f32.mrb[0].mxu0
  %v773 = vadd.f32 %v701, %v772
  %774 = vdwg.mxu0
  %v777 = vcombine.low %v771, %v773
  %v779 = vunpack.c.l.s4 1983009808
  %v780 = vunpack.c.0.s8 %v779
  %v781 = vlaneseq
  %v782 = vshrl.u32 %v781, 7
  %v783 = vsub.s32 %v780, %v782
  %v784 = vrot.slane %v777, %v783
  %786 = vst [vmem:[%s7] sm:$0xf] %v784
  // Predicated region
  $region30: #{hyena_operator_forward.1} parent=0 // pred_check
    _
  $region31: #{hyena_operator_forward.1} parent=0 // pred_check_branch
    %788 = sbr.rel (0) target = $region33
  $region32: #{hyena_operator_forward.1} parent=0 // pred_region
    _
  $region33: #{hyena_operator_forward.1} parent=0 // pred_fallthru
    _
  // Predicated region
  $region34: #{hyena_operator_forward.1} parent=0 // pred_check
    _
  $region35: #{hyena_operator_forward.1} parent=0 // pred_check_branch
    %790 = sbr.rel (0) target = $region37
  $region36: #{hyena_operator_forward.1} parent=0 // pred_region
    _
  $region37: #{hyena_operator_forward.1} parent=0 // pred_fallthru
    _

</llo_original>
